<compile_context>
chip_gen: v7x
topology: tpu7x:2x2x1
jax: 0.10.0
libtpu: 0.0.40
codegen_flags: <defaults>
</compile_context>

<pallas_src>
import functools

import jax
import jax.numpy as jnp
from jax.experimental import pallas as pl
from jax.experimental.pallas import tpu as pltpu

_LANES = 512            # lane-axis width of the flattened view (multiple of 128)
_MAX_TILE_ROWS = 1024   # up to (1024, 512) f32 = 2 MiB per input block
_NUM_SPLITS = 2         # leading 'parallel' axis for megacore (v7x) mean path
_VMEM_LIMIT = 32 * 1024 * 1024  # 2 in x 2 bufs x 2 MiB + acc/out << 32 MiB


def _round_up(x, m):
    return (x + m - 1) // m * m


def _focal_elementwise(x, y, alpha, gamma):
    """Elementwise focal loss in f32. `alpha` / `gamma` are static Python values."""
    p = jax.nn.sigmoid(x)
    # 1 - pt  where  pt = p*y + (1-p)*(1-y)
    one_minus_pt = p + y - 2.0 * p * y
    # binary_cross_entropy_with_logits, reduction='none' (numerically stable form)
    bce = jnp.maximum(x, 0.0) - x * y + jnp.log1p(jnp.exp(-jnp.abs(x)))

    g = float(gamma)
    if g == 0.0:
        loss = bce                        # (1 - pt)**0 == 1
    elif g == int(g) and 1 <= int(g) <= 4:
        f = one_minus_pt                  # small integer gamma -> VPU multiplies
        for _ in range(int(g) - 1):
            f = f * one_minus_pt
        loss = bce * f
    else:
        loss = bce * one_minus_pt ** g    # general float gamma -> pow

    if alpha:  # matches PyTorch `if self.alpha:` (skips None and 0.0)
        a = float(alpha)
        # at = alpha*y + (1-alpha)*(1-y) == (1-alpha) + (2*alpha-1)*y
        loss = ((1.0 - a) + (2.0 * a - 1.0) * y) * loss
    return loss


def _focal_mean_kernel(pred_ref, y_ref, out_ref, acc_ref, *,
                       alpha, gamma, n_total, steps, padded):
    c = pl.program_id(0)   # megacore split (parallel)
    i = pl.program_id(1)   # streaming / reduction axis (arbitrary)

    @pl.when(i == 0)
    def _():
        acc_ref[...] = jnp.zeros_like(acc_ref)

    x = pred_ref[...].astype(jnp.float32)
    y = y_ref[...].astype(jnp.float32)
    loss = _focal_elementwise(x, y, alpha, gamma)

    if padded:  # mask zero-padded tail elements (flat index >= n_total)
        blk_r, blk_c = loss.shape
        row_block = c * steps + i
        row = (jax.lax.broadcasted_iota(jnp.int32, (blk_r, blk_c), 0)
               + row_block * blk_r)
        col = jax.lax.broadcasted_iota(jnp.int32, (blk_r, blk_c), 1)
        loss = jnp.where(row * blk_c + col < n_total, loss, 0.0)

    acc_ref[...] += loss   # pure VPU elementwise accumulate

    @pl.when(i == steps - 1)
    def _():
        total = jnp.sum(acc_ref[...])   # single cross-lane reduce per core
        out_ref[...] = jnp.zeros((8, 128), jnp.float32) + total


def _focal_none_kernel(pred_ref, y_ref, out_ref, *, alpha, gamma):
    x = pred_ref[...].astype(jnp.float32)
    y = y_ref[...].astype(jnp.float32)
    out_ref[...] = _focal_elementwise(x, y, alpha, gamma).astype(out_ref.dtype)


def focal_loss(pred, y, *, alpha=None, gamma=0.0, reduction="mean"):
    """Pallas TPU focal loss matching FocalLoss.forward semantics.

    pred, y: same-shape float arrays (e.g. NCHW). reduction='mean' returns a
    float32 scalar; otherwise the elementwise loss with the input shape.
    """
    assert pred.shape == y.shape, "pred and y must have the same shape"
    orig_shape = pred.shape
    n_total = int(pred.size)

    lanes = _LANES
    m = -(-n_total // lanes)                         # rows of the (m, lanes) view
    tile_rows = min(_MAX_TILE_ROWS, _round_up(m, 8))

    pred_flat = pred.reshape(-1)
    y_flat = y.reshape(-1)

    if reduction == "mean":
        m_pad = _round_up(m, tile_rows * _NUM_SPLITS)
        steps = m_pad // (tile_rows * _NUM_SPLITS)
        pad = m_pad * lanes - n_total
        padded = pad != 0
        if pad:
            pred_flat = jnp.pad(pred_flat, (0, pad))
            y_flat = jnp.pad(y_flat, (0, pad))
        pred2 = pred_flat.reshape(m_pad, lanes)
        y2 = y_flat.reshape(m_pad, lanes)

        kernel = functools.partial(
            _focal_mean_kernel, alpha=alpha, gamma=gamma,
            n_total=n_total, steps=steps, padded=padded)

        partials = pl.pallas_call(
            kernel,
            out_shape=jax.ShapeDtypeStruct((_NUM_SPLITS * 8, 128), jnp.float32),
            grid_spec=pltpu.PrefetchScalarGridSpec(
                num_scalar_prefetch=0,
                grid=(_NUM_SPLITS, steps),
                in_specs=[
                    pl.BlockSpec((tile_rows, lanes), lambda c, i: (c * steps + i, 0)),
                    pl.BlockSpec((tile_rows, lanes), lambda c, i: (c * steps + i, 0)),
                ],
                out_specs=pl.BlockSpec((8, 128), lambda c, i: (c, 0)),
                scratch_shapes=[pltpu.VMEM((tile_rows, lanes), jnp.float32)],
            ),
            compiler_params=pltpu.CompilerParams(
                dimension_semantics=("parallel", "arbitrary"),
                vmem_limit_bytes=_VMEM_LIMIT,
            ),
            cost_estimate=pl.CostEstimate(
                flops=12 * n_total,
                transcendentals=2 * n_total,
                bytes_accessed=pred.nbytes + y.nbytes + _NUM_SPLITS * 8 * 128 * 4,
            ),
        )(pred2, y2)
        # Each core's (8,128) output block is filled with its partial sum.
        return partials[0::8, 0].sum() / n_total

    # reduction != 'mean' -> elementwise loss with the original shape
    out_dtype = jnp.result_type(pred.dtype, y.dtype)
    m_pad = _round_up(m, tile_rows)
    pad = m_pad * lanes - n_total
    if pad:
        pred_flat = jnp.pad(pred_flat, (0, pad))
        y_flat = jnp.pad(y_flat, (0, pad))
    pred2 = pred_flat.reshape(m_pad, lanes)
    y2 = y_flat.reshape(m_pad, lanes)

    kernel = functools.partial(_focal_none_kernel, alpha=alpha, gamma=gamma)
    out = pl.pallas_call(
        kernel,
        out_shape=jax.ShapeDtypeStruct((m_pad, lanes), out_dtype),
        grid_spec=pltpu.PrefetchScalarGridSpec(
            num_scalar_prefetch=0,
            grid=(m_pad // tile_rows,),
            in_specs=[
                pl.BlockSpec((tile_rows, lanes), lambda i: (i, 0)),
                pl.BlockSpec((tile_rows, lanes), lambda i: (i, 0)),
            ],
            out_specs=pl.BlockSpec((tile_rows, lanes), lambda i: (i, 0)),
        ),
        compiler_params=pltpu.CompilerParams(
            dimension_semantics=("parallel",),
            vmem_limit_bytes=_VMEM_LIMIT,
        ),
        cost_estimate=pl.CostEstimate(
            flops=12 * n_total,
            transcendentals=2 * n_total,
            bytes_accessed=(pred.nbytes + y.nbytes
                            + n_total * jnp.dtype(out_dtype).itemsize),
        ),
    )(pred2, y2)
    return out.reshape(-1)[:n_total].reshape(orig_shape)


def _focal_loss_ref(pred, y, alpha, gamma, reduction):
    # Pure-JAX reference mirroring the PyTorch forward exactly.
    p = jax.nn.sigmoid(pred)
    pt = p * y + (1 - p) * (1 - y)
    bce = jnp.maximum(pred, 0.0) - pred * y + jnp.log1p(jnp.exp(-jnp.abs(pred)))
    loss = bce * (1 - pt) ** gamma
    if alpha:
        at = alpha * y + (1 - alpha) * (1 - y)
        loss = at * loss
    if reduction == "mean":
        return loss.mean()
    return loss


if __name__ == "__main__":
    key = jax.random.PRNGKey(0)
    k1, k2, k3, k4 = jax.random.split(key, 4)

    # Small NCHW shapes consistent with the module's intended use.
    N, C, H, W = 2, 4, 16, 16
    pred = jax.random.normal(k1, (N, C, H, W), dtype=jnp.float32) * 2.0
    y = jax.random.bernoulli(k2, p=0.3, shape=(N, C, H, W)).astype(jnp.float32)

    alpha, gamma = 0.25, 2.0

    # reduction='mean'
    out_mean = jax.block_until_ready(
        focal_loss(pred, y, alpha=alpha, gamma=gamma, reduction="mean"))
    ref_mean = _focal_loss_ref(pred, y, alpha, gamma, "mean")
    assert jnp.allclose(out_mean, ref_mean, rtol=1e-5, atol=1e-6), (out_mean, ref_mean)

    # reduction='none'
    out_none = jax.block_until_ready(
        focal_loss(pred, y, alpha=alpha, gamma=gamma, reduction="none"))
    ref_none = _focal_loss_ref(pred, y, alpha, gamma, "none")
    assert out_none.shape == (N, C, H, W)
    assert jnp.allclose(out_none, ref_none, rtol=1e-5, atol=1e-6)

    # Non-divisible shape exercising the padding/masking path (default alpha/gamma).
    pred_odd = jax.random.normal(k3, (2, 3, 7, 5), dtype=jnp.float32)
    y_odd = jax.random.bernoulli(k4, p=0.5, shape=(2, 3, 7, 5)).astype(jnp.float32)
    out_odd = jax.block_until_ready(focal_loss(pred_odd, y_odd, reduction="mean"))
    ref_odd = _focal_loss_ref(pred_odd, y_odd, None, 0.0, "mean")
    assert jnp.allclose(out_odd, ref_odd, rtol=1e-5, atol=1e-6), (out_odd, ref_odd)

    print("KERNEL_OK")
</pallas_src>

<mosaic_0001>
module attributes {stable_mosaic.version = 11 : i64} {
  func.func @_focal_mean_kernel(%arg0: i32, %arg1: i32, %arg2: memref<8x512xf32, #tpu.memory_space<vmem>>, %arg3: memref<8x512xf32, #tpu.memory_space<vmem>>, %arg4: memref<8x128xf32, #tpu.memory_space<vmem>>, %arg5: memref<8x512xf32, #tpu.memory_space<vmem>>) attributes {dimension_semantics = [#tpu.dimension_semantics<parallel>, #tpu.dimension_semantics<arbitrary>], iteration_bounds = array<i64: 2, 1>, scalar_prefetch = 0 : i64, scratch_operands = 1 : i64, tpu.core_type = #tpu.core_type<tc>, window_params = [{transform_indices = @transform_0, window_bounds = array<i64: 8, 512>}, {transform_indices = @transform_1, window_bounds = array<i64: 8, 512>}, {transform_indices = @transform_2, window_bounds = array<i64: 8, 128>}]} {
    %c0_i32 = arith.constant 0 : i32
    %0 = arith.cmpi eq, %arg1, %c0_i32 : i32
    %1 = arith.extui %0 : i1 to i32
    %c0_i32_0 = arith.constant 0 : i32
    %2 = arith.cmpi ne, %1, %c0_i32_0 : i32
    scf.if %2 {
      %cst_16 = arith.constant 0.000000e+00 : f32
      %52 = vector.broadcast %cst_16 : f32 to vector<8x512xf32>
      %c0_17 = arith.constant 0 : index
      %c0_18 = arith.constant 0 : index
      %53 = vector.load %arg5[%c0_17, %c0_18] : memref<8x512xf32, #tpu.memory_space<vmem>>, vector<8x512xf32>
      tpu.vector_store %arg5[%c0_17, %c0_18], %52 {strides = array<i32>} : memref<8x512xf32, #tpu.memory_space<vmem>>, vector<8x512xf32>,
    } else {
    }
    %c0 = arith.constant 0 : index
    %c0_1 = arith.constant 0 : index
    %3 = vector.load %arg2[%c0, %c0_1] : memref<8x512xf32, #tpu.memory_space<vmem>>, vector<8x512xf32>
    %c0_2 = arith.constant 0 : index
    %c0_3 = arith.constant 0 : index
    %4 = vector.load %arg3[%c0_2, %c0_3] : memref<8x512xf32, #tpu.memory_space<vmem>>, vector<8x512xf32>
    %5 = arith.negf %3 : vector<8x512xf32>
    %6 = math.exp %5 : vector<8x512xf32>
    %cst = arith.constant 1.000000e+00 : f32
    %7 = vector.broadcast %cst : f32 to vector<8x512xf32>
    %8 = arith.addf %7, %6 : vector<8x512xf32>
    %9 = arith.divf %7, %8 : vector<8x512xf32>
    %10 = arith.addf %9, %4 : vector<8x512xf32>
    %cst_4 = arith.constant 2.000000e+00 : f32
    %11 = vector.broadcast %cst_4 : f32 to vector<8x512xf32>
    %12 = arith.mulf %11, %9 : vector<8x512xf32>
    %13 = arith.mulf %12, %4 : vector<8x512xf32>
    %14 = arith.subf %10, %13 : vector<8x512xf32>
    %cst_5 = arith.constant 0.000000e+00 : f32
    %15 = vector.broadcast %cst_5 : f32 to vector<8x512xf32>
    %16 = arith.maximumf %3, %15 : vector<8x512xf32>
    %17 = arith.mulf %3, %4 : vector<8x512xf32>
    %18 = arith.subf %16, %17 : vector<8x512xf32>
    %19 = math.absf %3 : vector<8x512xf32>
    %cst_6 = arith.constant 0.000000e+00 : f32
    %20 = vector.broadcast %cst_6 : f32 to vector<8x512xf32>
    %21 = arith.subf %20, %19 : vector<8x512xf32>
    %22 = math.exp %21 : vector<8x512xf32>
    %23 = math.log1p %22 : vector<8x512xf32>
    %24 = arith.addf %18, %23 : vector<8x512xf32>
    %25 = arith.mulf %14, %14 : vector<8x512xf32>
    %26 = arith.mulf %24, %25 : vector<8x512xf32>
    %cst_7 = arith.constant -5.000000e-01 : f32
    %27 = vector.broadcast %cst_7 : f32 to vector<8x512xf32>
    %28 = arith.mulf %27, %4 : vector<8x512xf32>
    %cst_8 = arith.constant 7.500000e-01 : f32
    %29 = vector.broadcast %cst_8 : f32 to vector<8x512xf32>
    %30 = arith.addf %29, %28 : vector<8x512xf32>
    %31 = arith.mulf %30, %26 : vector<8x512xf32>
    %c1_i32 = arith.constant 1 : i32
    %32 = arith.muli %arg0, %c1_i32 : i32
    %33 = arith.addi %32, %arg1 : i32
    %34 = tpu.iota {dimensions = array<i32: 0>} : vector<8x512xi32>
    %c8_i32 = arith.constant 8 : i32
    %35 = arith.muli %33, %c8_i32 : i32
    %36 = vector.broadcast %35 : i32 to vector<8x512xi32>
    %37 = arith.addi %34, %36 : vector<8x512xi32>
    %38 = tpu.iota {dimensions = array<i32: 1>} : vector<8x512xi32>
    %c512_i32 = arith.constant 512 : i32
    %39 = vector.broadcast %c512_i32 : i32 to vector<8x512xi32>
    %40 = arith.muli %37, %39 : vector<8x512xi32>
    %41 = arith.addi %40, %38 : vector<8x512xi32>
    %c2048_i32 = arith.constant 2048 : i32
    %42 = vector.broadcast %c2048_i32 : i32 to vector<8x512xi32>
    %43 = arith.cmpi slt, %41, %42 : vector<8x512xi32>
    %cst_9 = arith.constant 0.000000e+00 : f32
    %44 = vector.broadcast %cst_9 : f32 to vector<8x512xf32>
    %45 = arith.select %43, %31, %44 : vector<8x512xi1>, vector<8x512xf32>
    %c0_10 = arith.constant 0 : index
    %c0_11 = arith.constant 0 : index
    %46 = vector.load %arg5[%c0_10, %c0_11] : memref<8x512xf32, #tpu.memory_space<vmem>>, vector<8x512xf32>
    %47 = arith.addf %46, %45 : vector<8x512xf32>
    %c0_12 = arith.constant 0 : index
    %c0_13 = arith.constant 0 : index
    %48 = vector.load %arg5[%c0_12, %c0_13] : memref<8x512xf32, #tpu.memory_space<vmem>>, vector<8x512xf32>
    tpu.vector_store %arg5[%c0_12, %c0_13], %47 {strides = array<i32>} : memref<8x512xf32, #tpu.memory_space<vmem>>, vector<8x512xf32>,
    %c0_i32_14 = arith.constant 0 : i32
    %49 = arith.cmpi eq, %arg1, %c0_i32_14 : i32
    %50 = arith.extui %49 : i1 to i32
    %c0_i32_15 = arith.constant 0 : i32
    %51 = arith.cmpi ne, %50, %c0_i32_15 : i32
    scf.if %51 {
      %c0_16 = arith.constant 0 : index
      %c0_17 = arith.constant 0 : index
      %52 = vector.load %arg5[%c0_16, %c0_17] : memref<8x512xf32, #tpu.memory_space<vmem>>, vector<8x512xf32>
      %53 = vector.shape_cast %52 : vector<8x512xf32> to vector<1x8x512xf32>
      %cst_18 = arith.constant dense<0.000000e+00> : vector<1xf32>
      %54 = vector.multi_reduction <add>, %53, %cst_18 [1, 2] : vector<1x8x512xf32> to vector<1xf32>
      %55 = vector.shape_cast %54 : vector<1xf32> to vector<1x1x1xf32>
      %56 = vector.extract %55[0, 0, 0] : f32 from vector<1x1x1xf32>
      %cst_19 = arith.constant 0.000000e+00 : f32
      %57 = vector.broadcast %cst_19 : f32 to vector<8x128xf32>
      %58 = vector.broadcast %56 : f32 to vector<8x128xf32>
      %59 = arith.addf %57, %58 : vector<8x128xf32>
      %c0_20 = arith.constant 0 : index
      %c0_21 = arith.constant 0 : index
      %60 = vector.load %arg4[%c0_20, %c0_21] : memref<8x128xf32, #tpu.memory_space<vmem>>, vector<8x128xf32>
      tpu.vector_store %arg4[%c0_20, %c0_21], %59 {strides = array<i32>} : memref<8x128xf32, #tpu.memory_space<vmem>>, vector<8x128xf32>,
    } else {
    }
    return
  }
  func.func @transform_0(%arg0: i32, %arg1: i32) -> (i32, i32) {
    %c1_i32 = arith.constant 1 : i32
    %0 = arith.muli %arg0, %c1_i32 : i32
    %1 = arith.addi %0, %arg1 : i32
    %c0_i32 = arith.constant 0 : i32
    %c0_i32_0 = arith.constant 0 : i32
    return %1, %c0_i32 : i32, i32
  }
  func.func @transform_1(%arg0: i32, %arg1: i32) -> (i32, i32) {
    %c1_i32 = arith.constant 1 : i32
    %0 = arith.muli %arg0, %c1_i32 : i32
    %1 = arith.addi %0, %arg1 : i32
    %c0_i32 = arith.constant 0 : i32
    %c0_i32_0 = arith.constant 0 : i32
    return %1, %c0_i32 : i32, i32
  }
  func.func @transform_2(%arg0: i32, %arg1: i32) -> (i32, i32) {
    %c0_i32 = arith.constant 0 : i32
    %c0_i32_0 = arith.constant 0 : i32
    return %arg0, %c0_i32 : i32, i32
  }
}

</mosaic_0001>

<llo_original>
// kernel: tpu_custom_call.1
$region0: #{tpu_custom_call.1}
  #allocation0 [shape = 'u32[]', space=smem, size = 0x4, offset = 0x4, fixed_abs, tag = 'smem constant byte address 0x4 - core index']
  #allocation1 [shape = 'u32[144,128]{1,0:T(1,128)}', space=vmem, size = 0x12000, scoped, tag = 'internal scratch']
  #allocation2 [shape = 'f32[8,512]{1,0:T(8,128)}', space=vmem, size = 0x4000, scoped, tag = 'scratch operand']
  %s0 = inlined_call_operand.hbm [shape: f32[16,512], index: 0, kind: input, shape index: {}]
  %s1 = inlined_call_operand.hbm [shape: f32[16,512], index: 1, kind: input, shape index: {}]
  %s2 = inlined_call_operand.hbm [shape: f32[16,128], index: 2, kind: output, shape index: {}]
  %s3 = sld [smem:[#allocation0]]
  $region57: #{tpu_custom_call.1} parent=0
    _
  %s5 = ssub.s32 1, %s3
  %s6 = scalar_select 0, %s5, %s3
  $region1: #{tpu_custom_call.1} parent=0
    #allocation3 [shape = 'u8[32768]{0}', space=vmem, size = 0x8000, scoped, tag = 'input window, operand 0']
    #allocation4 [shape = 's32[2]{0}', space=sflag, size = 0x8, scoped, tag = 'scoped memory for tpu_custom_call.1']
    #allocation5 [shape = 's32[2]{0}', space=sflag, size = 0x8, scoped, tag = 'scoped memory for tpu_custom_call.1']
    #allocation6 [shape = 'u8[32768]{0}', space=vmem, size = 0x8000, scoped, tag = 'input window, operand 1']
    #allocation7 [shape = 's32[2]{0}', space=sflag, size = 0x8, scoped, tag = 'scoped memory for tpu_custom_call.1']
    #allocation8 [shape = 'u8[8192]{0}', space=vmem, size = 0x2000, scoped, tag = 'output window, operand 0']
    %7 = vsyncpa [#allocation4], 0
    %s8 = scalar_lea.sflag [#allocation4], 1
    %9 = vsyncpa %s8, 0
    %10 = vsyncpa [#allocation7], 0
    %s11 = scalar_lea.sflag [#allocation7], 1
    %12 = vsyncpa %s11, 0
    %13 = vsyncpa [#allocation5], 0
    %s14 = scalar_lea.sflag [#allocation5], 1
    %15 = vsyncpa %s14, 0
    loop: start=0, step=1, limit=4
    $region2: #{tpu_custom_call.1} parent=1 // loop_pre_header
      _
    $region3: #{tpu_custom_call.1} parent=1 // loop_header
      %s17 = sphi 0, %s21
      %p18 = scmp.ge.s32.totalorder %s17, 4
      %s24 = sphi 0, %s36
      %s25 = sphi 0, %s32
      %s26 = sphi 0, %s24
      %s27 = sphi 0, %s25
      %s28 = sphi 0, %s26
      %s29 = sphi 0, %s27
      %s41 = sphi 0, %s43
      %s44 = sphi 0, %s41
      %s45 = sphi 0, %s44
      %s61 = sphi 0, %s45
      %s69 = sphi 0, %s71
      %s72 = sphi 0, %s69
      %s73 = sphi 0, %s72
      %s89 = sphi 0, %s73
      %s95 = sphi 0, %s97
      %s98 = sphi 0, %s95
      %s99 = sphi 0, %s98
      %s115 = sphi 0, %s99
    $region4: #{tpu_custom_call.1} parent=1 // loop_header_branch
      %20 = sbr.rel (%p18) target = $region8
    $region5: #{tpu_custom_call.1} parent=1 // loop_body
      %s22 = ssub.s32 %s17, 1
      %s23 = ssub.s32 %s17, 2
      %s30 = sadd.s32 1, %s25
      %p31 = scmp.ge.s32.totalorder %s30, 1
      %s32 = scalar_select %p31, 0, %s30
      %s33 = sadd.s32 1, %s24
      %s34 = scalar_select %p31, %s33, %s24
      %p35 = scmp.ge.s32.totalorder %s34, 2
      %s36 = scalar_select %p35, 0, %s34
      %s37 = sadd.s32 %s24, %s25
      %s38 = sadd.s32 %s36, %s32
      %s39 = ssub.s32 %s37, %s38
      %p40 = scmp.eq.s32.totalorder %s39, 0
      %s42 = sadd.s32 %s41, 1
      %s43 = scalar_select %p40, %s41, %s42
      %p46 = pneg %p40
      %p47 = scmp.eq.s32.totalorder %s17, 1
      %p48 = por %p46, %p47
      %p49 = scmp.ne.s32.totalorder %s41, %s44
      %p50 = scmp.eq.s32.totalorder %s17, 0
      %p51 = por %p49, %p50
      %p52 = scmp.ne.s32.totalorder %s41, %s44
      %p53 = scmp.eq.s32.totalorder %s22, 1
      %p54 = por %p52, %p53
      %p55 = scmp.ne.s32.totalorder %s44, %s45
      %p56 = scmp.eq.s32.totalorder %s22, 0
      %p57 = por %p55, %p56
      %p58 = scmp.ne.s32.totalorder %s44, %s45
      %p59 = scmp.eq.s32.totalorder %s23, 1
      %p60 = por %p58, %p59
      %p62 = scmp.ne.s32.totalorder %s45, %s61
      %p63 = scmp.eq.s32.totalorder %s23, 0
      %p64 = por %p62, %p63
      %s65 = sadd.s32 %s24, %s25
      %s66 = sadd.s32 %s36, %s32
      %s67 = ssub.s32 %s65, %s66
      %p68 = scmp.eq.s32.totalorder %s67, 0
      %s70 = sadd.s32 %s69, 1
      %s71 = scalar_select %p68, %s69, %s70
      %p74 = pneg %p68
      %p75 = scmp.eq.s32.totalorder %s17, 1
      %p76 = por %p74, %p75
      %p77 = scmp.ne.s32.totalorder %s69, %s72
      %p78 = scmp.eq.s32.totalorder %s17, 0
      %p79 = por %p77, %p78
      %p80 = scmp.ne.s32.totalorder %s69, %s72
      %p81 = scmp.eq.s32.totalorder %s22, 1
      %p82 = por %p80, %p81
      %p83 = scmp.ne.s32.totalorder %s72, %s73
      %p84 = scmp.eq.s32.totalorder %s22, 0
      %p85 = por %p83, %p84
      %p86 = scmp.ne.s32.totalorder %s72, %s73
      %p87 = scmp.eq.s32.totalorder %s23, 1
      %p88 = por %p86, %p87
      %p90 = scmp.ne.s32.totalorder %s73, %s89
      %p91 = scmp.eq.s32.totalorder %s23, 0
      %p92 = por %p90, %p91
      %s93 = ssub.s32 %s24, %s36
      %p94 = scmp.eq.s32.totalorder %s93, 0
      %s96 = sadd.s32 %s95, 1
      %s97 = scalar_select %p94, %s95, %s96
      %p100 = pneg %p94
      %p101 = scmp.eq.s32.totalorder %s17, 1
      %p102 = por %p100, %p101
      %p103 = scmp.ne.s32.totalorder %s95, %s98
      %p104 = scmp.eq.s32.totalorder %s17, 0
      %p105 = por %p103, %p104
      %p106 = scmp.ne.s32.totalorder %s95, %s98
      %p107 = scmp.eq.s32.totalorder %s22, 1
      %p108 = por %p106, %p107
      %p109 = scmp.ne.s32.totalorder %s98, %s99
      %p110 = scmp.eq.s32.totalorder %s22, 0
      %p111 = por %p109, %p110
      %p112 = scmp.ne.s32.totalorder %s98, %s99
      %p113 = scmp.eq.s32.totalorder %s23, 1
      %p114 = por %p112, %p113
      %p116 = scmp.ne.s32.totalorder %s99, %s115
      %p117 = scmp.eq.s32.totalorder %s23, 0
      %p118 = por %p116, %p117
      %p119 = scmp.le.s32.totalorder 1, %s17
      %p120 = scmp.lt.s32.totalorder %s17, 3
      %p121 = pnand %p119, %p120
      %p122 = pneg %p121
      // Predicated region
      $region9: #{tpu_custom_call.1} parent=5 // pred_check
        _
      $region10: #{tpu_custom_call.1} parent=5 // pred_check_branch
        %124 = sbr.rel (%p121) target = $region12
      $region11: #{tpu_custom_call.1} parent=5 // pred_region
        %s125 = ssub.s32 %s17, 1
      $region12: #{tpu_custom_call.1} parent=5 // pred_fallthru
        _
      %p126 = scmp.lt.s32.totalorder %s17, 2
      // Predicated region
      $region13: #{tpu_custom_call.1} parent=5 // pred_check
        %p127 = pneg %p126
      $region14: #{tpu_custom_call.1} parent=5 // pred_check_branch
        %129 = sbr.rel (%p127) target = $region16
      $region15: #{tpu_custom_call.1} parent=5 // pred_region
        // Predicated region
        $region17: #{tpu_custom_call.1} parent=15 // pred_check
          %p130 = pneg %p51
        $region18: #{tpu_custom_call.1} parent=15 // pred_check_branch
          %132 = sbr.rel (%p130) target = $region20
        $region19: #{tpu_custom_call.1} parent=15 // pred_region
          %s133 = sand.u32 %s41, 1
          %s134 = scalar_lea.sflag [#allocation4], %s133
          %s135 = sand.u32 %s41, 1
          %s136 = smul.addr %s135, 32
          %s137 = scalar_lea.vmem [#allocation3], %s136
          %s138 = sadd.s32 %s24, %s25
          %s140 = ssub.s32 512, 512
          %141 = vsyncadd %s134, %s140
          %s142 = smul.addr %s138, 4
          %s143 = smul.addr %s142, 128
          %s144 = scalar_lea.hbm %s0, %s143
          %s146 = sshll.u32 %s137, 4
          %s147 = int_to_ptr.vmem [resolvable:$true] %s146
          %149 = dma.hbm_to_vmem [thread:$0]  %s144, 512, %s147, %s134
        $region20: #{tpu_custom_call.1} parent=15 // pred_fallthru
          _
        // Predicated region
        $region21: #{tpu_custom_call.1} parent=15 // pred_check
          %p150 = pneg %p79
        $region22: #{tpu_custom_call.1} parent=15 // pred_check_branch
          %152 = sbr.rel (%p150) target = $region24
        $region23: #{tpu_custom_call.1} parent=15 // pred_region
          %s153 = sand.u32 %s69, 1
          %s154 = scalar_lea.sflag [#allocation7], %s153
          %s155 = sand.u32 %s69, 1
          %s156 = smul.addr %s155, 32
          %s157 = scalar_lea.vmem [#allocation6], %s156
          %s158 = sadd.s32 %s24, %s25
          %s160 = ssub.s32 512, 512
          %161 = vsyncadd %s154, %s160
          %s162 = smul.addr %s158, 4
          %s163 = smul.addr %s162, 128
          %s164 = scalar_lea.hbm %s1, %s163
          %s166 = sshll.u32 %s157, 4
          %s167 = int_to_ptr.vmem [resolvable:$true] %s166
          %169 = dma.hbm_to_vmem [thread:$0]  %s164, 512, %s167, %s154
        $region24: #{tpu_custom_call.1} parent=15 // pred_fallthru
          _
      $region16: #{tpu_custom_call.1} parent=5 // pred_fallthru
        _
      %p170 = scmp.le.s32.totalorder 1, %s17
      %p171 = scmp.lt.s32.totalorder %s17, 3
      %p172 = pnand %p170, %p171
      %p173 = pneg %p172
      // Predicated region
      $region25: #{tpu_custom_call.1} parent=5 // pred_check
        _
      $region26: #{tpu_custom_call.1} parent=5 // pred_check_branch
        %175 = sbr.rel (%p172) target = $region28
      $region27: #{tpu_custom_call.1} parent=5 // pred_region
        %s176 = ssub.s32 %s17, 1
        %s177 = sand.u32 %s44, 1
        %s178 = scalar_lea.sflag [#allocation4], %s177
        %s179 = sand.u32 %s44, 1
        %s180 = smul.addr %s179, 32
        %s181 = scalar_lea.vmem [#allocation3], %s180
        // Predicated region
        $region29: #{tpu_custom_call.1} parent=27 // pred_check
          %p182 = pneg %p57
        $region30: #{tpu_custom_call.1} parent=27 // pred_check_branch
          %184 = sbr.rel (%p182) target = $region32
        $region31: #{tpu_custom_call.1} parent=27 // pred_region
          %185 = dma.done %s178, 512
        $region32: #{tpu_custom_call.1} parent=27 // pred_fallthru
          _
        %s186 = sand.u32 %s72, 1
        %s187 = scalar_lea.sflag [#allocation7], %s186
        %s188 = sand.u32 %s72, 1
        %s189 = smul.addr %s188, 32
        %s190 = scalar_lea.vmem [#allocation6], %s189
        // Predicated region
        $region33: #{tpu_custom_call.1} parent=27 // pred_check
          %p191 = pneg %p85
        $region34: #{tpu_custom_call.1} parent=27 // pred_check_branch
          %193 = sbr.rel (%p191) target = $region36
        $region35: #{tpu_custom_call.1} parent=27 // pred_region
          %194 = dma.done %s187, 512
        $region36: #{tpu_custom_call.1} parent=27 // pred_fallthru
          _
        %s195 = sand.u32 %s44, 1
        %s196 = scalar_lea.sflag [#allocation4], %s195
        %s197 = sand.u32 %s44, 1
        %s198 = smul.addr %s197, 32
        %s199 = scalar_lea.vmem [#allocation3], %s198
        %p200 = pneg %p57
        %p201 = pneg %p54
        %s202 = sand.u32 %s72, 1
        %s203 = scalar_lea.sflag [#allocation7], %s202
        %s204 = sand.u32 %s72, 1
        %s205 = smul.addr %s204, 32
        %s206 = scalar_lea.vmem [#allocation6], %s205
        %p207 = pneg %p85
        %p208 = pneg %p82
        %p209 = pneg %p111
        %p210 = pneg %p108
        %s211 = sand.u32 %s98, 1
        %s212 = scalar_lea.sflag [#allocation5], %s211
        %s213 = sand.u32 %s98, 1
        %s214 = smul.addr %s213, 8
        %s215 = scalar_lea.vmem [#allocation8], %s214
        %s216 = sadd.s32 %s26, %s27
        %s217 = sadd.s32 %s26, %s27
        %p218 = scmp.eq.s32.totalorder %s27, 0
        // Predicated region
        $region37: #{tpu_custom_call.1} parent=27 // pred_check
          %p219 = pneg %p218
        $region38: #{tpu_custom_call.1} parent=27 // pred_check_branch
          %221 = sbr.rel (%p219) target = $region40
        $region39: #{tpu_custom_call.1} parent=27 // pred_region
          %222 = vst [vmem:[#allocation2] sm:$0xff] 0.0
          %223 = vst [vmem:[#allocation2 + $0x8] sm:$0xff] 0.0
          %224 = vst [vmem:[#allocation2 + $0x10] sm:$0xff] 0.0
          %225 = vst [vmem:[#allocation2 + $0x18] sm:$0xff] 0.0
        $region40: #{tpu_custom_call.1} parent=27 // pred_fallthru
          _
        %v226 = vld [vmem:[%s181] sm:$0xff]
        %v227 = vld [vmem:[%s181 + $0x8] sm:$0xff]
        %v228 = vld [vmem:[%s181 + $0x10] sm:$0xff]
        %v229 = vld [vmem:[%s181 + $0x18] sm:$0xff]
        %v230 = vld [vmem:[%s190] sm:$0xff]
        %v231 = vld [vmem:[%s190 + $0x8] sm:$0xff]
        %v232 = vld [vmem:[%s190 + $0x10] sm:$0xff]
        %v233 = vld [vmem:[%s190 + $0x18] sm:$0xff]
        %v234 = vxor.u32 %v226, 2147483648
        %v235 = vxor.u32 %v227, 2147483648
        %v236 = vxor.u32 %v228, 2147483648
        %v237 = vxor.u32 %v229, 2147483648
        %v238 = vmul.f32 %v234, 1.442695
        %v239 = vpow.pop %v238
        %v240 = vmul.f32 %v235, 1.442695
        %v241 = vpow.pop %v240
        %v242 = vmul.f32 %v236, 1.442695
        %v243 = vpow.pop %v242
        %v244 = vmul.f32 %v237, 1.442695
        %v245 = vpow.pop %v244
        %v246 = vadd.f32 %v239, 1.0
        %v247 = vadd.f32 %v241, 1.0
        %v248 = vadd.f32 %v243, 1.0
        %v249 = vadd.f32 %v245, 1.0
        %v250 = vrcp.pop %v246
        %v251 = vmul.f32 1.0, %v250
        %v252 = vrcp.pop %v247
        %v253 = vmul.f32 1.0, %v252
        %v254 = vrcp.pop %v248
        %v255 = vmul.f32 1.0, %v254
        %v256 = vrcp.pop %v249
        %v257 = vmul.f32 1.0, %v256
        %v258 = vadd.f32 %v251, %v230
        %v259 = vadd.f32 %v253, %v231
        %v260 = vadd.f32 %v255, %v232
        %v261 = vadd.f32 %v257, %v233
        %v262 = vmul.f32 %v251, 2.0
        %v263 = vmul.f32 %v253, 2.0
        %v264 = vmul.f32 %v255, 2.0
        %v265 = vmul.f32 %v257, 2.0
        %v266 = vmul.f32 %v262, %v230
        %v267 = vmul.f32 %v263, %v231
        %v268 = vmul.f32 %v264, %v232
        %v269 = vmul.f32 %v265, %v233
        %v270 = vsub.f32 %v258, %v266
        %v271 = vsub.f32 %v259, %v267
        %v272 = vsub.f32 %v260, %v268
        %v273 = vsub.f32 %v261, %v269
        %v274 = vmax.f32 %v226, 0.0
        %v275 = vmax.f32 %v227, 0.0
        %v276 = vmax.f32 %v228, 0.0
        %v277 = vmax.f32 %v229, 0.0
        %v278 = vmul.f32 %v226, %v230
        %v279 = vmul.f32 %v227, %v231
        %v280 = vmul.f32 %v228, %v232
        %v281 = vmul.f32 %v229, %v233
        %v282 = vsub.f32 %v274, %v278
        %v283 = vsub.f32 %v275, %v279
        %v284 = vsub.f32 %v276, %v280
        %v285 = vsub.f32 %v277, %v281
        %v286 = vand.u32 2147483647, %v226
        %v287 = vand.u32 2147483647, %v227
        %v288 = vand.u32 2147483647, %v228
        %v289 = vand.u32 2147483647, %v229
        %v290 = vsub.f32 0.0, %v286
        %v291 = vsub.f32 0.0, %v287
        %v292 = vsub.f32 0.0, %v288
        %v293 = vsub.f32 0.0, %v289
        %v294 = vmul.f32 %v290, 1.442695
        %v295 = vpow.pop %v294
        %v296 = vmul.f32 %v291, 1.442695
        %v297 = vpow.pop %v296
        %v298 = vmul.f32 %v292, 1.442695
        %v299 = vpow.pop %v298
        %v300 = vmul.f32 %v293, 1.442695
        %v301 = vpow.pop %v300
        %v302 = vadd.f32 %v295, 1.0
        %v303 = vlog2.pop %v302
        %v304 = vmul.f32 %v303, 0.6931472
        %v305 = vmul.f32 -0.5, %v295
        %v306 = vadd.f32 %v305, 1.0
        %v307 = vmul.f32 %v306, %v295
        %v308 = vand.u32 2147483647, %v295
        %vm309 = vcmp.lt.f32.partialorder %v308, 0.0004427343
        %v310 = vsel %vm309, %v307, %v304
        %v311 = vadd.f32 %v297, 1.0
        %v312 = vlog2.pop %v311
        %v313 = vmul.f32 %v312, 0.6931472
        %v314 = vmul.f32 -0.5, %v297
        %v315 = vadd.f32 %v314, 1.0
        %v316 = vmul.f32 %v315, %v297
        %v317 = vand.u32 2147483647, %v297
        %vm318 = vcmp.lt.f32.partialorder %v317, 0.0004427343
        %v319 = vsel %vm318, %v316, %v313
        %v320 = vadd.f32 %v299, 1.0
        %v321 = vlog2.pop %v320
        %v322 = vmul.f32 %v321, 0.6931472
        %v323 = vmul.f32 -0.5, %v299
        %v324 = vadd.f32 %v323, 1.0
        %v325 = vmul.f32 %v324, %v299
        %v326 = vand.u32 2147483647, %v299
        %vm327 = vcmp.lt.f32.partialorder %v326, 0.0004427343
        %v328 = vsel %vm327, %v325, %v322
        %v329 = vadd.f32 %v301, 1.0
        %v330 = vlog2.pop %v329
        %v331 = vmul.f32 %v330, 0.6931472
        %v332 = vmul.f32 -0.5, %v301
        %v333 = vadd.f32 %v332, 1.0
        %v334 = vmul.f32 %v333, %v301
        %v335 = vand.u32 2147483647, %v301
        %vm336 = vcmp.lt.f32.partialorder %v335, 0.0004427343
        %v337 = vsel %vm336, %v334, %v331
        %v338 = vadd.f32 %v282, %v310
        %v339 = vadd.f32 %v283, %v319
        %v340 = vadd.f32 %v284, %v328
        %v341 = vadd.f32 %v285, %v337
        %v342 = vmul.f32 %v270, %v270
        %v343 = vmul.f32 %v271, %v271
        %v344 = vmul.f32 %v272, %v272
        %v345 = vmul.f32 %v273, %v273
        %v346 = vmul.f32 %v338, %v342
        %v347 = vmul.f32 %v339, %v343
        %v348 = vmul.f32 %v340, %v344
        %v349 = vmul.f32 %v341, %v345
        %v350 = vmul.f32 %v230, -0.5
        %v351 = vmul.f32 %v231, -0.5
        %v352 = vmul.f32 %v232, -0.5
        %v353 = vmul.f32 %v233, -0.5
        %v354 = vadd.f32 %v350, 0.75
        %v355 = vadd.f32 %v351, 0.75
        %v356 = vadd.f32 %v352, 0.75
        %v357 = vadd.f32 %v353, 0.75
        %v358 = vmul.f32 %v354, %v346
        %v359 = vmul.f32 %v355, %v347
        %v360 = vmul.f32 %v356, %v348
        %v361 = vmul.f32 %v357, %v349
        %s362 = sadd.s32 %s26, %s27
        %v363 = vlaneseq
        %v364 = vshrl.u32 %v363, 7
        %s365 = smul.u32 %s362, 8
        %v366 = vstv %s365
        %v367 = vadd.s32 %v364, %v366
        %v368 = vlaneseq
        %v369 = vand.u32 %v368, 127
        %v370 = vadd.s32 %v369, 128
        %v371 = vadd.s32 %v369, 256
        %v372 = vadd.s32 %v369, 384
        %v373 = vmul.u32 %v367, 512
        %v374 = vadd.s32 %v373, %v369
        %v375 = vadd.s32 %v373, %v370
        %v376 = vadd.s32 %v373, %v371
        %v377 = vadd.s32 %v373, %v372
        %vm378 = vcmp.lt.s32.totalorder %v374, 2048
        %vm379 = vcmp.lt.s32.totalorder %v375, 2048
        %vm380 = vcmp.lt.s32.totalorder %v376, 2048
        %vm381 = vcmp.lt.s32.totalorder %v377, 2048
        %v382 = vsel %vm378, %v358, 0.0
        %v383 = vsel %vm379, %v359, 0.0
        %v384 = vsel %vm380, %v360, 0.0
        %v385 = vsel %vm381, %v361, 0.0
        %v386 = vld [vmem:[#allocation2] sm:$0xff]
        %v387 = vld [vmem:[#allocation2 + $0x8] sm:$0xff]
        %v388 = vld [vmem:[#allocation2 + $0x10] sm:$0xff]
        %v389 = vld [vmem:[#allocation2 + $0x18] sm:$0xff]
        %v390 = vadd.f32 %v386, %v382
        %v391 = vadd.f32 %v387, %v383
        %v392 = vadd.f32 %v388, %v384
        %v393 = vadd.f32 %v389, %v385
        %394 = vst [vmem:[#allocation2] sm:$0xff] %v390
        %395 = vst [vmem:[#allocation2 + $0x8] sm:$0xff] %v391
        %396 = vst [vmem:[#allocation2 + $0x10] sm:$0xff] %v392
        %397 = vst [vmem:[#allocation2 + $0x18] sm:$0xff] %v393
        // Predicated region
        $region41: #{tpu_custom_call.1} parent=27 // pred_check
          %p398 = pneg %p218
        $region42: #{tpu_custom_call.1} parent=27 // pred_check_branch
          %400 = sbr.rel (%p398) target = $region44
        $region43: #{tpu_custom_call.1} parent=27 // pred_region
          %v401 = vld [vmem:[#allocation2] sm:$0xff]
          %v402 = vld [vmem:[#allocation2 + $0x8] sm:$0xff]
          %v403 = vld [vmem:[#allocation2 + $0x10] sm:$0xff]
          %v404 = vld [vmem:[#allocation2 + $0x18] sm:$0xff]
          %v405 = vadd.f32 %v401, %v402
          %v406 = vadd.f32 %v405, %v403
          %v407 = vadd.f32 %v406, %v404
          %408 = vadd.xlane.f32.xlu0 %v407
          %v409 = vpop.xlane.xlu0 %408
          %v410 = vrot.slane %v409, 4
          %v411 = vadd.f32 %v409, %v410
          %v412 = vrot.slane %v411, 2
          %v413 = vadd.f32 %v411, %v412
          %v414 = vrot.slane %v413, 1
          %v415 = vadd.f32 %v413, %v414
          %s416 = vtos %v415
          %v417 = vstv %s416
          %v418 = vadd.f32 %v417, 0.0
          %419 = vst [vmem:[%s215] sm:$0xff] %v418
        $region44: #{tpu_custom_call.1} parent=27 // pred_fallthru
          _
        %s420 = sand.u32 %s98, 1
        %s421 = scalar_lea.sflag [#allocation5], %s420
        %s422 = sand.u32 %s98, 1
        %s423 = smul.addr %s422, 8
        %s424 = scalar_lea.vmem [#allocation8], %s423
        // Predicated region
        $region45: #{tpu_custom_call.1} parent=27 // pred_check
          %p425 = pneg %p108
        $region46: #{tpu_custom_call.1} parent=27 // pred_check_branch
          %427 = sbr.rel (%p425) target = $region48
        $region47: #{tpu_custom_call.1} parent=27 // pred_region
          %s429 = ssub.s32 128, 128
          %430 = vsyncadd %s421, %s429
          %s431 = smul.addr %s26, 128
          %s432 = scalar_lea.hbm %s2, %s431
          %s434 = sshll.u32 %s424, 4
          %s435 = int_to_ptr.vmem [resolvable:$true] %s434
          %437 = dma.vmem_to_hbm [thread:$0]  %s435, 128, %s432, %s421
        $region48: #{tpu_custom_call.1} parent=27 // pred_fallthru
          _
      $region28: #{tpu_custom_call.1} parent=5 // pred_fallthru
        _
      %p438 = scmp.le.s32.totalorder 2, %s17
      // Predicated region
      $region49: #{tpu_custom_call.1} parent=5 // pred_check
        %p439 = pneg %p438
      $region50: #{tpu_custom_call.1} parent=5 // pred_check_branch
        %441 = sbr.rel (%p439) target = $region52
      $region51: #{tpu_custom_call.1} parent=5 // pred_region
        %s442 = ssub.s32 %s17, 2
        // Predicated region
        $region53: #{tpu_custom_call.1} parent=51 // pred_check
          %p443 = pneg %p114
        $region54: #{tpu_custom_call.1} parent=51 // pred_check_branch
          %445 = sbr.rel (%p443) target = $region56
        $region55: #{tpu_custom_call.1} parent=51 // pred_region
          %s446 = sand.u32 %s99, 1
          %s447 = scalar_lea.sflag [#allocation5], %s446
          %s448 = sand.u32 %s99, 1
          %s449 = smul.addr %s448, 8
          %s450 = scalar_lea.vmem [#allocation8], %s449
          %451 = dma.done %s447, 128
        $region56: #{tpu_custom_call.1} parent=51 // pred_fallthru
          _
      $region52: #{tpu_custom_call.1} parent=5 // pred_fallthru
        _
    $region6: #{tpu_custom_call.1} parent=1 // loop_footer
      %s21 = sadd.s32 1, %s17
    $region7: #{tpu_custom_call.1} parent=1 // loop_footer_branch
      %16 = sbr.rel target = $region3
    $region8: #{tpu_custom_call.1} parent=1 // loop_exit
      _
    %452 = vsyncpa [#allocation4], 1
    %s453 = scalar_lea.sflag [#allocation4], 1
    %454 = vsyncpa %s453, 1
    %455 = vsyncpa [#allocation7], 1
    %s456 = scalar_lea.sflag [#allocation7], 1
    %457 = vsyncpa %s456, 1
    %458 = vsyncpa [#allocation5], 1
    %s459 = scalar_lea.sflag [#allocation5], 1
    %460 = vsyncpa %s459, 1

</llo_original>
